<compile_context>
chip_gen: v6e
topology: v6e:2x2x1
jax: 0.10.0
libtpu: 0.0.40
codegen_flags: <defaults>
</compile_context>

<pallas_src>
import functools

import jax
import jax.numpy as jnp
from jax import lax
from jax.experimental import pallas as pl
from jax.experimental.pallas import tpu as pltpu


def _round_up(x, m):
    return ((x + m - 1) // m) * m


def dti_pooling_kernel(drug_ref, target_ref, wd_ref, bd_ref, wt_ref, bt_ref,
                       out_ref, *, apply_mask=True):
    # Upcast to f32 for all elementwise work (v5e has no bf16 VPU).
    drug = drug_ref[...].astype(jnp.float32)          # (TB, Dd)
    tgt = target_ref[...].astype(jnp.float32)         # (TB, S, Dt)

    if apply_mask:
        # Masked mean pooling over seq (mask = target != -1).
        valid = tgt != -1.0
        masked_sum = jnp.sum(jnp.where(valid, tgt, 0.0), axis=1)      # (TB, Dt)
        count = jnp.sum(valid.astype(jnp.float32), axis=1)            # (TB, Dt)
        # Guard all-padded (count==0) features; reciprocal runs on the EUP.
        agg = masked_sum * pl.reciprocal(jnp.maximum(count, 1.0), approx=True)
    else:
        # 2-D target path of the module: no pooling (seq axis is length 1).
        agg = tgt[:, 0, :]                                            # (TB, Dt)

    # Projections: MXU matmul in the storage/compute dtype, f32 accumulation.
    cdt = wd_ref.dtype
    dp = jnp.dot(drug.astype(cdt), wd_ref[...],
                 preferred_element_type=jnp.float32) + bd_ref[...]
    dp = jnp.maximum(dp, 0.0)                                         # (TB, Lp)
    tp = jnp.dot(agg.astype(cdt), wt_ref[...],
                 preferred_element_type=jnp.float32) + bt_ref[...]
    tp = jnp.maximum(tp, 0.0)                                         # (TB, Lp)

    # Cosine similarity: single rsqrt (EUP) instead of two sqrt + divide.
    eps = 1e-8
    num = jnp.sum(dp * tp, axis=-1)                                   # (TB,)
    dn2 = jnp.sum(dp * dp, axis=-1)
    tn2 = jnp.sum(tp * tp, axis=-1)
    sim = num * lax.rsqrt(jnp.maximum(dn2 * tn2, eps * eps))
    out_ref[...] = sim[None, :]                                       # (1, TB) lane-dense


def _choose_batch_tile(S, Dt, Dd, Lp, storage_itemsize, vmem_limit_bytes):
    """Largest batch tile (multiple of 128, capped at 1024) that keeps the
    double-buffered blocks + f32 intermediates well under the VMEM limit."""
    per_row = (2 * S * Dt * storage_itemsize   # target block, 2 buffers
               + 3 * S * Dt * 4                # f32 upcast / select temps
               + 2 * Dd * 4                    # drug block, 2 buffers
               + 6 * Lp * 4                    # dp / tp / products
               + 2 * Dt * 4)                   # agg / count
    budget = int(vmem_limit_bytes * 0.75)
    tb = budget // max(per_row, 1)
    return max(128, min(1024, (tb // 128) * 128))


def dti_pooling_forward(drug, target, wd, bd, wt, bt, *,
                        storage_dtype=jnp.bfloat16,
                        batch_tile=None,
                        vmem_limit_bytes=32 * 1024 * 1024):
    """drug: (B, drug_dim); target: (B, seq, target_dim) or (B, target_dim).
    Weights stored as (in_dim, latent_dim); biases as (latent_dim,).
    Returns the (B,) cosine-similarity "distance" of the module."""
    drug = jnp.asarray(drug, jnp.float32)
    target = jnp.asarray(target, jnp.float32)

    apply_mask = target.ndim == 3
    if target.ndim == 2:
        target = target[:, None, :]   # module skips pooling for 2-D targets

    B, S, Dt = target.shape
    Dd = drug.shape[1]
    L = wd.shape[1]

    storage_dtype = jnp.dtype(storage_dtype)

    # Lane-pad the latent dim so projections / cosine reductions are full-vreg.
    Lp = _round_up(L, 128)
    wd_p = jnp.zeros((Dd, Lp), storage_dtype).at[:, :L].set(wd.astype(storage_dtype))
    wt_p = jnp.zeros((Dt, Lp), storage_dtype).at[:, :L].set(wt.astype(storage_dtype))
    bd_p = jnp.zeros((1, Lp), jnp.float32).at[:, :L].set(
        jnp.asarray(bd, jnp.float32).reshape(1, -1))
    bt_p = jnp.zeros((1, Lp), jnp.float32).at[:, :L].set(
        jnp.asarray(bt, jnp.float32).reshape(1, -1))

    # bf16 (default) storage halves HBM traffic for the dominant (B,S,Dt)
    # operand; the kernel upcasts to f32 for the elementwise/pooling path.
    target = target.astype(storage_dtype)

    if batch_tile is None:
        batch_tile = _choose_batch_tile(S, Dt, Dd, Lp, storage_dtype.itemsize,
                                        vmem_limit_bytes)

    if B <= batch_tile:
        TB, B_pad = B, B
    else:
        assert batch_tile % 128 == 0, "batch_tile must be a multiple of 128"
        TB = batch_tile
        B_pad = _round_up(B, TB)
        pad = B_pad - B
        drug = jnp.pad(drug, ((0, pad), (0, 0)))
        target = jnp.pad(target, ((0, pad), (0, 0), (0, 0)))

    grid = (pl.cdiv(B_pad, TB),)
    kernel = functools.partial(dti_pooling_kernel, apply_mask=apply_mask)

    # NOTE: on v7x, sweeping pipeline_mode=pl.Buffered(3) on the target spec
    # may further hide DMA latency; default double-buffering is used here.
    out = pl.pallas_call(
        kernel,
        out_shape=jax.ShapeDtypeStruct((1, B_pad), jnp.float32),
        grid_spec=pltpu.PrefetchScalarGridSpec(
            num_scalar_prefetch=0,
            grid=grid,
            in_specs=[
                pl.BlockSpec((TB, Dd), lambda i: (i, 0)),        # drug (batch-tiled)
                pl.BlockSpec((TB, S, Dt), lambda i: (i, 0, 0)),  # target (batch-tiled)
                pl.BlockSpec((Dd, Lp), lambda i: (0, 0)),        # weights stay resident
                pl.BlockSpec((1, Lp), lambda i: (0, 0)),
                pl.BlockSpec((Dt, Lp), lambda i: (0, 0)),
                pl.BlockSpec((1, Lp), lambda i: (0, 0)),
            ],
            # Lane-dense output: batch lives on the lane axis.
            out_specs=pl.BlockSpec((1, TB), lambda i: (0, i)),
        ),
        compiler_params=pltpu.CompilerParams(
            dimension_semantics=("parallel",),   # v7x: shard batch tiles over 2 TCs
            vmem_limit_bytes=vmem_limit_bytes,
        ),
    )(drug, target, wd_p, bd_p, wt_p, bt_p)

    return out[0, :B]


def init_params(key, drug_dim, target_dim, latent_dim):
    """Deterministic params matching the module (xavier_normal weights)."""
    k1, k2, k3, k4 = jax.random.split(key, 4)

    def xavier_normal(k, fan_in, fan_out):
        std = (2.0 / (fan_in + fan_out)) ** 0.5
        return std * jax.random.normal(k, (fan_in, fan_out), dtype=jnp.float32)

    wd = xavier_normal(k1, drug_dim, latent_dim)
    wt = xavier_normal(k2, target_dim, latent_dim)
    bd = 0.01 * jax.random.normal(k3, (latent_dim,), dtype=jnp.float32)
    bt = 0.01 * jax.random.normal(k4, (latent_dim,), dtype=jnp.float32)
    return wd, bd, wt, bt


def reference_forward(drug, target, wd, bd, wt, bt):
    """Pure-JAX reference of the PyTorch forward (count guarded vs 0)."""
    mask = (target != -1.0).astype(jnp.float32)
    count = jnp.maximum(jnp.sum(mask, axis=1), 1.0)
    agg = jnp.sum(target * mask, axis=1) / count
    dp = jnp.maximum(drug @ wd + bd, 0.0)
    tp = jnp.maximum(agg @ wt + bt, 0.0)
    num = jnp.sum(dp * tp, axis=-1)
    den = jnp.maximum(jnp.linalg.norm(dp, axis=-1) * jnp.linalg.norm(tp, axis=-1), 1e-8)
    return num / den


if __name__ == "__main__":
    B, SEQ = 2, 8
    DRUG_DIM, TARGET_DIM, LATENT_DIM = 16, 32, 32

    key = jax.random.PRNGKey(0)
    kd, kt, kp, km = jax.random.split(key, 4)

    drug = jax.random.normal(kd, (B, DRUG_DIM), dtype=jnp.float32)
    target = jax.random.normal(kt, (B, SEQ, TARGET_DIM), dtype=jnp.float32)
    pad_mask = jax.random.bernoulli(km, 0.2, (B, SEQ, TARGET_DIM))
    target = jnp.where(pad_mask, -1.0, target)

    wd, bd, wt, bt = init_params(kp, DRUG_DIM, TARGET_DIM, LATENT_DIM)
    ref = reference_forward(drug, target, wd, bd, wt, bt)

    # 1) f32 storage path (tight parity with the f32 reference).
    out_f32 = dti_pooling_forward(drug, target, wd, bd, wt, bt,
                                  storage_dtype=jnp.float32)
    out_f32 = jax.block_until_ready(out_f32)
    assert out_f32.shape == (B,)
    assert jnp.allclose(out_f32, ref, atol=2e-3, rtol=2e-3), (out_f32, ref)

    # 2) Default optimized (bf16 storage) path — looser tolerance for bf16.
    out_bf16 = dti_pooling_forward(drug, target, wd, bd, wt, bt)
    out_bf16 = jax.block_until_ready(out_bf16)
    assert out_bf16.shape == (B,)
    assert jnp.allclose(out_bf16, ref, atol=3e-2, rtol=3e-2), (out_bf16, ref)

    # 3) Batch-gridded path: B > tile forces grid=2, batch padding, and the
    #    lane-dense multi-block output.
    B2 = 160
    k2d, k2t, k2m = jax.random.split(jax.random.PRNGKey(1), 3)
    drug2 = jax.random.normal(k2d, (B2, DRUG_DIM), dtype=jnp.float32)
    target2 = jax.random.normal(k2t, (B2, SEQ, TARGET_DIM), dtype=jnp.float32)
    pad2 = jax.random.bernoulli(k2m, 0.2, (B2, SEQ, TARGET_DIM))
    target2 = jnp.where(pad2, -1.0, target2)
    ref2 = reference_forward(drug2, target2, wd, bd, wt, bt)
    out2 = dti_pooling_forward(drug2, target2, wd, bd, wt, bt,
                               storage_dtype=jnp.float32, batch_tile=128)
    out2 = jax.block_until_ready(out2)
    assert out2.shape == (B2,)
    assert jnp.allclose(out2, ref2, atol=2e-3, rtol=2e-3), (out2, ref2)

    print("KERNEL_OK")
</pallas_src>

<mosaic_0001>
module attributes {stable_mosaic.version = 11 : i64} {
  func.func @dti_pooling_kernel(%arg0: i32, %arg1: memref<2x16xf32, #tpu.memory_space<vmem>>, %arg2: memref<2x8x32xf32, #tpu.memory_space<vmem>>, %arg3: memref<16x128xf32, #tpu.memory_space<vmem>>, %arg4: memref<1x128xf32, #tpu.memory_space<vmem>>, %arg5: memref<32x128xf32, #tpu.memory_space<vmem>>, %arg6: memref<1x128xf32, #tpu.memory_space<vmem>>, %arg7: memref<1x2xf32, #tpu.memory_space<vmem>>) attributes {dimension_semantics = [#tpu.dimension_semantics<parallel>], iteration_bounds = array<i64: 1>, scalar_prefetch = 0 : i64, scratch_operands = 0 : i64, tpu.core_type = #tpu.core_type<tc>, window_params = [{transform_indices = @transform_0, window_bounds = array<i64: 2, 16>}, {transform_indices = @transform_1, window_bounds = array<i64: 2, 8, 32>}, {pipeline_mode = #tpu.pipeline_mode<synchronous>, transform_indices = @transform_2, window_bounds = array<i64: 16, 128>}, {pipeline_mode = #tpu.pipeline_mode<synchronous>, transform_indices = @transform_3, window_bounds = array<i64: 1, 128>}, {pipeline_mode = #tpu.pipeline_mode<synchronous>, transform_indices = @transform_4, window_bounds = array<i64: 32, 128>}, {pipeline_mode = #tpu.pipeline_mode<synchronous>, transform_indices = @transform_5, window_bounds = array<i64: 1, 128>}, {transform_indices = @transform_6, window_bounds = array<i64: 1, 2>}]} {
    %c0 = arith.constant 0 : index
    %c0_0 = arith.constant 0 : index
    %0 = vector.load %arg1[%c0, %c0_0] : memref<2x16xf32, #tpu.memory_space<vmem>>, vector<2x16xf32>
    %c0_1 = arith.constant 0 : index
    %c0_2 = arith.constant 0 : index
    %c0_3 = arith.constant 0 : index
    %1 = vector.load %arg2[%c0_1, %c0_2, %c0_3] : memref<2x8x32xf32, #tpu.memory_space<vmem>>, vector<2x8x32xf32>
    %cst = arith.constant -1.000000e+00 : f32
    %2 = vector.broadcast %cst : f32 to vector<2x8x32xf32>
    %3 = arith.cmpf one, %1, %2 : vector<2x8x32xf32>
    %cst_4 = arith.constant 0.000000e+00 : f32
    %4 = vector.broadcast %cst_4 : f32 to vector<2x8x32xf32>
    %5 = arith.select %3, %1, %4 : vector<2x8x32xi1>, vector<2x8x32xf32>
    %cst_5 = arith.constant dense<0.000000e+00> : vector<2x32xf32>
    %6 = vector.multi_reduction <add>, %5, %cst_5 [1] : vector<2x8x32xf32> to vector<2x32xf32>
    %7 = arith.extui %3 : vector<2x8x32xi1> to vector<2x8x32xi32>
    %8 = arith.sitofp %7 : vector<2x8x32xi32> to vector<2x8x32xf32>
    %cst_6 = arith.constant dense<0.000000e+00> : vector<2x32xf32>
    %9 = vector.multi_reduction <add>, %8, %cst_6 [1] : vector<2x8x32xf32> to vector<2x32xf32>
    %cst_7 = arith.constant 1.000000e+00 : f32
    %10 = vector.broadcast %cst_7 : f32 to vector<2x32xf32>
    %11 = arith.maximumf %9, %10 : vector<2x32xf32>
    %12 = tpu.reciprocal %11 {approx = true} : vector<2x32xf32> -> vector<2x32xf32>
    %13 = arith.mulf %6, %12 : vector<2x32xf32>
    %c0_8 = arith.constant 0 : index
    %c0_9 = arith.constant 0 : index
    %14 = vector.load %arg3[%c0_8, %c0_9] : memref<16x128xf32, #tpu.memory_space<vmem>>, vector<16x128xf32>
    %cst_10 = arith.constant dense<0.000000e+00> : vector<2x128xf32>
    %15 = tpu.matmul %0, %14, %cst_10 {dimension_numbers = #tpu.dot_dimension_numbers<[1], [0], [0], [1], [0, 0, 1, 1], [], []>} : vector<2x16xf32>, vector<16x128xf32>, vector<2x128xf32> -> vector<2x128xf32>
    %c0_11 = arith.constant 0 : index
    %c0_12 = arith.constant 0 : index
    %16 = vector.load %arg4[%c0_11, %c0_12] : memref<1x128xf32, #tpu.memory_space<vmem>>, vector<1x128xf32>
    %17 = vector.broadcast %16 : vector<1x128xf32> to vector<2x128xf32>
    %18 = arith.addf %15, %17 : vector<2x128xf32>
    %cst_13 = arith.constant 0.000000e+00 : f32
    %19 = vector.broadcast %cst_13 : f32 to vector<2x128xf32>
    %20 = arith.maximumf %18, %19 : vector<2x128xf32>
    %c0_14 = arith.constant 0 : index
    %c0_15 = arith.constant 0 : index
    %21 = vector.load %arg5[%c0_14, %c0_15] : memref<32x128xf32, #tpu.memory_space<vmem>>, vector<32x128xf32>
    %cst_16 = arith.constant dense<0.000000e+00> : vector<2x128xf32>
    %22 = tpu.matmul %13, %21, %cst_16 {dimension_numbers = #tpu.dot_dimension_numbers<[1], [0], [0], [1], [0, 0, 1, 1], [], []>} : vector<2x32xf32>, vector<32x128xf32>, vector<2x128xf32> -> vector<2x128xf32>
    %c0_17 = arith.constant 0 : index
    %c0_18 = arith.constant 0 : index
    %23 = vector.load %arg6[%c0_17, %c0_18] : memref<1x128xf32, #tpu.memory_space<vmem>>, vector<1x128xf32>
    %24 = vector.broadcast %23 : vector<1x128xf32> to vector<2x128xf32>
    %25 = arith.addf %22, %24 : vector<2x128xf32>
    %cst_19 = arith.constant 0.000000e+00 : f32
    %26 = vector.broadcast %cst_19 : f32 to vector<2x128xf32>
    %27 = arith.maximumf %25, %26 : vector<2x128xf32>
    %28 = arith.mulf %20, %27 : vector<2x128xf32>
    %cst_20 = arith.constant dense<0.000000e+00> : vector<2xf32>
    %29 = vector.multi_reduction <add>, %28, %cst_20 [1] : vector<2x128xf32> to vector<2xf32>
    %30 = arith.mulf %20, %20 : vector<2x128xf32>
    %cst_21 = arith.constant dense<0.000000e+00> : vector<2xf32>
    %31 = vector.multi_reduction <add>, %30, %cst_21 [1] : vector<2x128xf32> to vector<2xf32>
    %32 = arith.mulf %27, %27 : vector<2x128xf32>
    %cst_22 = arith.constant dense<0.000000e+00> : vector<2xf32>
    %33 = vector.multi_reduction <add>, %32, %cst_22 [1] : vector<2x128xf32> to vector<2xf32>
    %34 = arith.mulf %31, %33 : vector<2xf32>
    %cst_23 = arith.constant 1.000000e-16 : f32
    %35 = vector.broadcast %cst_23 : f32 to vector<2xf32>
    %36 = arith.maximumf %34, %35 : vector<2xf32>
    %37 = math.rsqrt %36 : vector<2xf32>
    %38 = arith.mulf %29, %37 : vector<2xf32>
    %39 = vector.shape_cast %38 : vector<2xf32> to vector<1x2xf32>
    %c0_24 = arith.constant 0 : index
    %c0_25 = arith.constant 0 : index
    %40 = vector.load %arg7[%c0_24, %c0_25] : memref<1x2xf32, #tpu.memory_space<vmem>>, vector<1x2xf32>
    tpu.vector_store %arg7[%c0_24, %c0_25], %39 {strides = array<i32>} : memref<1x2xf32, #tpu.memory_space<vmem>>, vector<1x2xf32>,
    return
  }
  func.func @transform_0(%arg0: i32) -> (i32, i32) {
    %c0_i32 = arith.constant 0 : i32
    %c0_i32_0 = arith.constant 0 : i32
    return %arg0, %c0_i32 : i32, i32
  }
  func.func @transform_1(%arg0: i32) -> (i32, i32, i32) {
    %c0_i32 = arith.constant 0 : i32
    %c0_i32_0 = arith.constant 0 : i32
    %c0_i32_1 = arith.constant 0 : i32
    return %arg0, %c0_i32, %c0_i32_0 : i32, i32, i32
  }
  func.func @transform_2(%arg0: i32) -> (i32, i32) {
    %c0_i32 = arith.constant 0 : i32
    %c0_i32_0 = arith.constant 0 : i32
    %c0_i32_1 = arith.constant 0 : i32
    return %c0_i32, %c0_i32_0 : i32, i32
  }
  func.func @transform_3(%arg0: i32) -> (i32, i32) {
    %c0_i32 = arith.constant 0 : i32
    %c0_i32_0 = arith.constant 0 : i32
    %c0_i32_1 = arith.constant 0 : i32
    return %c0_i32, %c0_i32_0 : i32, i32
  }
  func.func @transform_4(%arg0: i32) -> (i32, i32) {
    %c0_i32 = arith.constant 0 : i32
    %c0_i32_0 = arith.constant 0 : i32
    %c0_i32_1 = arith.constant 0 : i32
    return %c0_i32, %c0_i32_0 : i32, i32
  }
  func.func @transform_5(%arg0: i32) -> (i32, i32) {
    %c0_i32 = arith.constant 0 : i32
    %c0_i32_0 = arith.constant 0 : i32
    %c0_i32_1 = arith.constant 0 : i32
    return %c0_i32, %c0_i32_0 : i32, i32
  }
  func.func @transform_6(%arg0: i32) -> (i32, i32) {
    %c0_i32 = arith.constant 0 : i32
    %c0_i32_0 = arith.constant 0 : i32
    return %c0_i32, %arg0 : i32, i32
  }
}

</mosaic_0001>

<llo_original>
// kernel: tpu_custom_call.1
$region0: #{tpu_custom_call.1}
  #allocation0 [shape = 'u32[]', space=smem, size = 0x4, offset = 0x4, fixed_abs, tag = 'smem constant byte address 0x4 - core index']
  #allocation1 [shape = 'u32[144,128]{1,0:T(1,128)}', space=vmem, size = 0x12000, scoped, tag = 'internal scratch']
  %s0 = inlined_call_operand.hbm [shape: f32[2,16], index: 0, kind: input, shape index: {}]
  %s1 = inlined_call_operand.hbm [shape: f32[2,8,32], index: 1, kind: input, shape index: {}]
  %s2 = inlined_call_operand.hbm [shape: f32[16,128], index: 2, kind: input, shape index: {}]
  %s3 = inlined_call_operand.vmem [shape: f32[1,128], index: 3, kind: input, shape index: {}]
  %s4 = inlined_call_operand.hbm [shape: f32[32,128], index: 4, kind: input, shape index: {}]
  %s5 = inlined_call_operand.vmem [shape: f32[1,128], index: 5, kind: input, shape index: {}]
  %s6 = inlined_call_operand.hbm [shape: f32[1,2], index: 6, kind: output, shape index: {}]
  %s7 = sld [smem:[#allocation0]]
  $region50: #{tpu_custom_call.1} parent=0
    _
  %s9 = ssub.s32 1, %s7
  %s10 = scalar_select 0, %s9, %s7
  $region1: #{tpu_custom_call.1} parent=0
    #allocation2 [shape = 'u8[1024]{0}', space=vmem, size = 0x400, scoped, tag = 'input window, operand 0, single buffered']
    #allocation3 [shape = 's32[1]{0}', space=sflag, size = 0x4, scoped, tag = 'scoped memory for tpu_custom_call.1']
    #allocation4 [shape = 's32[1]{0}', space=sflag, size = 0x4, scoped, tag = 'scoped memory for tpu_custom_call.1']
    #allocation5 [shape = 'u8[8192]{0}', space=vmem, size = 0x2000, scoped, tag = 'input window, operand 1, single buffered']
    #allocation6 [shape = 's32[1]{0}', space=sflag, size = 0x4, scoped, tag = 'scoped memory for tpu_custom_call.1']
    #allocation7 [shape = 'u8[8192]{0}', space=vmem, size = 0x2000, scoped, tag = 'input window, operand 2, single buffered']
    #allocation8 [shape = 'u8[16384]{0}', space=vmem, size = 0x4000, scoped, tag = 'input window, operand 4, single buffered']
    #allocation9 [shape = 's32[1]{0}', space=sflag, size = 0x4, scoped, tag = 'scoped memory for tpu_custom_call.1']
    #allocation10 [shape = 'u8[512]{0}', space=vmem, size = 0x400, scoped, tag = 'output window, operand 0, single buffered']
    %11 = vsyncpa [#allocation3], 0
    %12 = vsyncpa [#allocation6], 0
    %13 = vsyncpa [#allocation9], 0
    %14 = vsyncpa [#allocation4], 0
    // Predicated region
    $region2: #{tpu_custom_call.1} parent=1 // pred_check
      _
    $region3: #{tpu_custom_call.1} parent=1 // pred_check_branch
      %16 = sbr.rel (0) target = $region5
    $region4: #{tpu_custom_call.1} parent=1 // pred_region
      %s18 = ssub.s32 32, 32
      %19 = vsyncadd [#allocation3], %s18
      %s21 = sshll.u32 [#allocation2], 4
      %s22 = int_to_ptr.vmem [resolvable:$true] %s21
      %24 = dma.hbm_to_vmem [thread:$0]  %s0, 32, %s22, [#allocation3]
    $region5: #{tpu_custom_call.1} parent=1 // pred_fallthru
      _
    // Predicated region
    $region6: #{tpu_custom_call.1} parent=1 // pred_check
      _
    $region7: #{tpu_custom_call.1} parent=1 // pred_check_branch
      %26 = sbr.rel (0) target = $region9
    $region8: #{tpu_custom_call.1} parent=1 // pred_region
      %s28 = ssub.s32 256, 256
      %29 = vsyncadd [#allocation6], %s28
      %s30 = sshll.u32 [#allocation5], 4
      %s31 = int_to_ptr.vmem [resolvable:$true] %s30
      %36 = dma.hbm_to_vmem [thread:$0]  %s1, 256, %s31, [#allocation6], 128, 128, 8
    $region9: #{tpu_custom_call.1} parent=1 // pred_fallthru
      _
    // Predicated region
    $region10: #{tpu_custom_call.1} parent=1 // pred_check
      _
    $region11: #{tpu_custom_call.1} parent=1 // pred_check_branch
      %38 = sbr.rel (0) target = $region13
    $region12: #{tpu_custom_call.1} parent=1 // pred_region
      %s40 = ssub.s32 256, 256
      %41 = vsyncadd [#allocation6], %s40
      %s42 = sshll.u32 [#allocation7], 4
      %s43 = int_to_ptr.vmem [resolvable:$true] %s42
      %48 = dma.hbm_to_vmem [thread:$0]  %s2, 256, %s43, [#allocation6], 128, 128, 8
    $region13: #{tpu_custom_call.1} parent=1 // pred_fallthru
      _
    // Predicated region
    $region14: #{tpu_custom_call.1} parent=1 // pred_check
      _
    $region15: #{tpu_custom_call.1} parent=1 // pred_check_branch
      %50 = sbr.rel (0) target = $region17
    $region16: #{tpu_custom_call.1} parent=1 // pred_region
      _
    $region17: #{tpu_custom_call.1} parent=1 // pred_fallthru
      _
    // Predicated region
    $region18: #{tpu_custom_call.1} parent=1 // pred_check
      _
    $region19: #{tpu_custom_call.1} parent=1 // pred_check_branch
      %52 = sbr.rel (0) target = $region21
    $region20: #{tpu_custom_call.1} parent=1 // pred_region
      %s54 = ssub.s32 512, 512
      %55 = vsyncadd [#allocation9], %s54
      %s56 = sshll.u32 [#allocation8], 4
      %s57 = int_to_ptr.vmem [resolvable:$true] %s56
      %62 = dma.hbm_to_vmem [thread:$0]  %s4, 512, %s57, [#allocation9], 128, 128, 8
    $region21: #{tpu_custom_call.1} parent=1 // pred_fallthru
      _
    // Predicated region
    $region22: #{tpu_custom_call.1} parent=1 // pred_check
      _
    $region23: #{tpu_custom_call.1} parent=1 // pred_check_branch
      %64 = sbr.rel (0) target = $region25
    $region24: #{tpu_custom_call.1} parent=1 // pred_region
      _
    $region25: #{tpu_custom_call.1} parent=1 // pred_fallthru
      _
    // Predicated region
    $region26: #{tpu_custom_call.1} parent=1 // pred_check
      _
    $region27: #{tpu_custom_call.1} parent=1 // pred_check_branch
      %66 = sbr.rel (0) target = $region29
    $region28: #{tpu_custom_call.1} parent=1 // pred_region
      %67 = dma.done [#allocation3], 32
    $region29: #{tpu_custom_call.1} parent=1 // pred_fallthru
      _
    // Predicated region
    $region30: #{tpu_custom_call.1} parent=1 // pred_check
      _
    $region31: #{tpu_custom_call.1} parent=1 // pred_check_branch
      %69 = sbr.rel (0) target = $region33
    $region32: #{tpu_custom_call.1} parent=1 // pred_region
      %70 = dma.done [#allocation6], 256
    $region33: #{tpu_custom_call.1} parent=1 // pred_fallthru
      _
    // Predicated region
    $region34: #{tpu_custom_call.1} parent=1 // pred_check
      _
    $region35: #{tpu_custom_call.1} parent=1 // pred_check_branch
      %72 = sbr.rel (0) target = $region37
    $region36: #{tpu_custom_call.1} parent=1 // pred_region
      %73 = dma.done [#allocation6], 256
    $region37: #{tpu_custom_call.1} parent=1 // pred_fallthru
      _
    // Predicated region
    $region38: #{tpu_custom_call.1} parent=1 // pred_check
      _
    $region39: #{tpu_custom_call.1} parent=1 // pred_check_branch
      %75 = sbr.rel (0) target = $region41
    $region40: #{tpu_custom_call.1} parent=1 // pred_region
      %76 = dma.done [#allocation9], 512
    $region41: #{tpu_custom_call.1} parent=1 // pred_fallthru
      _
    %v77 = vld [vmem:[#allocation2] sm:$0x3]
    %v78 = vld [vmem:[#allocation5] sm:$0xff]
    %v79 = vld [vmem:[#allocation5 + $0x8] sm:$0xff]
    %vm80 = vcmp.ne.f32.partialorder %v78, -1.0
    %vm81 = vcmp.ne.f32.partialorder %v79, -1.0
    %v82 = vsel %vm80, %v78, 0.0
    %v83 = vsel %vm81, %v79, 0.0
    %vm84 = vcmask 261120
    %v85 = vsel %vm84, %v82, 0.0
    %v86 = vrot.slane %v85, 4
    %v87 = vadd.f32 %v85, %v86
    %v88 = vrot.slane %v87, 2
    %v89 = vadd.f32 %v87, %v88
    %v90 = vrot.slane %v89, 1
    %v91 = vadd.f32 %v89, %v90
    %v92 = vsel %vm84, %v83, 0.0
    %v93 = vrot.slane %v92, 4
    %v94 = vadd.f32 %v92, %v93
    %v95 = vrot.slane %v94, 2
    %v96 = vadd.f32 %v94, %v95
    %v97 = vrot.slane %v96, 1
    %v98 = vadd.f32 %v96, %v97
    %v99 = vsel %vm80, 1, 0
    %v100 = vsel %vm81, 1, 0
    %v101 = vcvt.s32.f32 %v99
    %v102 = vcvt.s32.f32 %v100
    %v103 = vsel %vm84, %v101, 0.0
    %v104 = vrot.slane %v103, 4
    %v105 = vadd.f32 %v103, %v104
    %v106 = vrot.slane %v105, 2
    %v107 = vadd.f32 %v105, %v106
    %v108 = vrot.slane %v107, 1
    %v109 = vadd.f32 %v107, %v108
    %v110 = vsel %vm84, %v102, 0.0
    %v111 = vrot.slane %v110, 4
    %v112 = vadd.f32 %v110, %v111
    %v113 = vrot.slane %v112, 2
    %v114 = vadd.f32 %v112, %v113
    %v115 = vrot.slane %v114, 1
    %v116 = vadd.f32 %v114, %v115
    %v117 = vmax.f32 %v109, 1.0
    %v118 = vmax.f32 %v116, 1.0
    %v119 = vrcp.pop %v117
    %v120 = vrcp.pop %v118
    %v121 = vmul.f32 %v91, %v119
    %v122 = vmul.f32 %v98, %v120
    %v123 = vld [vmem:[#allocation7] sm:$0xff]
    %v124 = vld [vmem:[#allocation7 + $0x8] sm:$0xff]
    %v125 = vld [vmem:[%s3] sm:$0x1]
    %v127 = vlaneseq
    %v128 = vshrl.u32 %v127, 7
    %v129 = vsub.s32 0, %v128
    %v130 = vrot.slane %v125, %v129
    %vm132 = vcmask 130048
    %v134 = vsel %vm132, %v77, 0
    %136 = vmatprep.subr.mxu0 0.0
    %137 = vmatpush1.msra.mxu0 0.0
    %138 = vmatprep.subr.mxu0 0.0
    %139 = vmatpush1.msra.mxu0 0.0
    %140 = vmatprep.subr.mxu0 0.0
    %141 = vmatpush1.msra.mxu0 0.0
    %142 = vmatprep.subr.mxu0 0.0
    %143 = vmatpush1.msra.mxu0 0.0
    %144 = vmatprep.subr.mxu0 0.0
    %145 = vmatpush1.msra.mxu0 0.0
    %146 = vmatprep.subr.mxu0 0.0
    %147 = vmatpush1.msra.mxu0 0.0
    %148 = vmatprep.subr.mxu0 0.0
    %149 = vmatpush1.msra.mxu0 0.0
    %150 = vmatprep.subr.mxu0 0.0
    %151 = vmatpush1.msra.mxu0 0.0
    %152 = vmatprep.subr.mxu0 0.0
    %153 = vmatpush1.msra.mxu0 0.0
    %154 = vmatprep.subr.mxu0 0.0
    %155 = vmatpush1.msra.mxu0 0.0
    %156 = vmatprep.subr.mxu0 0.0
    %157 = vmatpush1.msra.mxu0 0.0
    %158 = vmatprep.subr.mxu0 0.0
    %159 = vmatpush1.msra.mxu0 0.0
    %160 = vmatprep.subr.mxu0 0.0
    %161 = vmatpush1.msra.mxu0 0.0
    %162 = vmatprep.subr.mxu0 0.0
    %163 = vmatpush1.msra.mxu0 0.0
    %164 = vmatprep.subr.mxu0 0.0
    %165 = vmatpush1.msra.mxu0 %v124
    %166 = vmatprep.subr.mxu0 0.0
    %167 = vmatpush1.msra.mxu0 %v123
    %168 = vmatprep.subr.mxu0 0.0
    %169 = vmatpush2.msra.mxu0 0.0
    %170 = vmatprep.subr.mxu0 0.0
    %171 = vmatpush2.msra.mxu0 0.0
    %172 = vmatprep.subr.mxu0 0.0
    %173 = vmatpush2.msra.mxu0 0.0
    %174 = vmatprep.subr.mxu0 0.0
    %175 = vmatpush2.msra.mxu0 0.0
    %176 = vmatprep.subr.mxu0 0.0
    %177 = vmatpush2.msra.mxu0 0.0
    %178 = vmatprep.subr.mxu0 0.0
    %179 = vmatpush2.msra.mxu0 0.0
    %180 = vmatprep.subr.mxu0 0.0
    %181 = vmatpush2.msra.mxu0 0.0
    %182 = vmatprep.subr.mxu0 0.0
    %183 = vmatpush2.msra.mxu0 0.0
    %184 = vmatprep.subr.mxu0 0.0
    %185 = vmatpush2.msra.mxu0 0.0
    %186 = vmatprep.subr.mxu0 0.0
    %187 = vmatpush2.msra.mxu0 0.0
    %188 = vmatprep.subr.mxu0 0.0
    %189 = vmatpush2.msra.mxu0 0.0
    %190 = vmatprep.subr.mxu0 0.0
    %191 = vmatpush2.msra.mxu0 0.0
    %192 = vmatprep.subr.mxu0 0.0
    %193 = vmatpush2.msra.mxu0 0.0
    %194 = vmatprep.subr.mxu0 0.0
    %195 = vmatpush2.msra.mxu0 0.0
    %196 = vmatprep.subr.mxu0 0.0
    %197 = vmatpush2.msra.mxu0 0.0
    %198 = vmatprep.subr.mxu0 0.0
    %199 = vmatpush2.msra.mxu0 0.0
    %200 = vmatprep.mubr.f32.mxu0 0.0
    %201 = vmatmul.mubr.f32.gmra.mxu0 %v134
    %v202 = vpop.f32.mrf.mxu0
    %v203 = vadd.f32 %v130, %v202
    %v204 = vpop.f32.mrf.mxu0
    %205 = vdwg.mxu0
    %v206 = vmax.f32 %v203, 0.0
    %v207 = vld [vmem:[#allocation8] sm:$0xff]
    %v208 = vld [vmem:[#allocation8 + $0x8] sm:$0xff]
    %v209 = vld [vmem:[#allocation8 + $0x10] sm:$0xff]
    %v210 = vld [vmem:[#allocation8 + $0x18] sm:$0xff]
    %v211 = vld [vmem:[%s5] sm:$0x1]
    %v213 = vlaneseq
    %v214 = vshrl.u32 %v213, 7
    %v215 = vsub.s32 0, %v214
    %v216 = vrot.slane %v211, %v215
    %vm220 = vcmask 1041409
    %v221 = vsel %vm220, %v122, %v121
    %v222 = vsel %vm84, %v221, 0
    %224 = vmatprep.subr.mxu0 0.0
    %225 = vmatpush1.msra.mxu0 0.0
    %226 = vmatprep.subr.mxu0 0.0
    %227 = vmatpush1.msra.mxu0 0.0
    %228 = vmatprep.subr.mxu0 0.0
    %229 = vmatpush1.msra.mxu0 0.0
    %230 = vmatprep.subr.mxu0 0.0
    %231 = vmatpush1.msra.mxu0 0.0
    %232 = vmatprep.subr.mxu0 0.0
    %233 = vmatpush1.msra.mxu0 0.0
    %234 = vmatprep.subr.mxu0 0.0
    %235 = vmatpush1.msra.mxu0 0.0
    %236 = vmatprep.subr.mxu0 0.0
    %237 = vmatpush1.msra.mxu0 0.0
    %238 = vmatprep.subr.mxu0 0.0
    %239 = vmatpush1.msra.mxu0 0.0
    %240 = vmatprep.subr.mxu0 0.0
    %241 = vmatpush1.msra.mxu0 0.0
    %242 = vmatprep.subr.mxu0 0.0
    %243 = vmatpush1.msra.mxu0 0.0
    %244 = vmatprep.subr.mxu0 0.0
    %245 = vmatpush1.msra.mxu0 0.0
    %246 = vmatprep.subr.mxu0 0.0
    %247 = vmatpush1.msra.mxu0 0.0
    %248 = vmatprep.subr.mxu0 0.0
    %249 = vmatpush1.msra.mxu0 %v210
    %250 = vmatprep.subr.mxu0 0.0
    %251 = vmatpush1.msra.mxu0 %v209
    %252 = vmatprep.subr.mxu0 0.0
    %253 = vmatpush1.msra.mxu0 %v208
    %254 = vmatprep.subr.mxu0 0.0
    %255 = vmatpush1.msra.mxu0 %v207
    %256 = vmatprep.subr.mxu0 0.0
    %257 = vmatpush2.msra.mxu0 0.0
    %258 = vmatprep.subr.mxu0 0.0
    %259 = vmatpush2.msra.mxu0 0.0
    %260 = vmatprep.subr.mxu0 0.0
    %261 = vmatpush2.msra.mxu0 0.0
    %262 = vmatprep.subr.mxu0 0.0
    %263 = vmatpush2.msra.mxu0 0.0
    %264 = vmatprep.subr.mxu0 0.0
    %265 = vmatpush2.msra.mxu0 0.0
    %266 = vmatprep.subr.mxu0 0.0
    %267 = vmatpush2.msra.mxu0 0.0
    %268 = vmatprep.subr.mxu0 0.0
    %269 = vmatpush2.msra.mxu0 0.0
    %270 = vmatprep.subr.mxu0 0.0
    %271 = vmatpush2.msra.mxu0 0.0
    %272 = vmatprep.subr.mxu0 0.0
    %273 = vmatpush2.msra.mxu0 0.0
    %274 = vmatprep.subr.mxu0 0.0
    %275 = vmatpush2.msra.mxu0 0.0
    %276 = vmatprep.subr.mxu0 0.0
    %277 = vmatpush2.msra.mxu0 0.0
    %278 = vmatprep.subr.mxu0 0.0
    %279 = vmatpush2.msra.mxu0 0.0
    %280 = vmatprep.subr.mxu0 0.0
    %281 = vmatpush2.msra.mxu0 0.0
    %282 = vmatprep.subr.mxu0 0.0
    %283 = vmatpush2.msra.mxu0 0.0
    %284 = vmatprep.subr.mxu0 0.0
    %285 = vmatpush2.msra.mxu0 0.0
    %286 = vmatprep.subr.mxu0 0.0
    %287 = vmatpush2.msra.mxu0 0.0
    %288 = vmatprep.mubr.f32.mxu0 0.0
    %289 = vmatmul.mubr.f32.gmra.mxu0 %v222
    %v290 = vpop.f32.mrf.mxu0
    %v291 = vadd.f32 %v216, %v290
    %v292 = vpop.f32.mrf.mxu0
    %293 = vdwg.mxu0
    %v294 = vmax.f32 %v291, 0.0
    %v295 = vmul.f32 %v206, %v294
    %vm296 = vcmask 1041408
    %v297 = vsel %vm296, %v295, 0.0
    %298 = vadd.xlane.f32.xlu0 %v297
    %v299 = vpop.xlane.xlu0 %298
    %v300 = vmul.f32 %v206, %v206
    %v301 = vsel %vm296, %v300, 0.0
    %302 = vadd.xlane.f32.xlu0 %v301
    %v303 = vpop.xlane.xlu0 %302
    %v304 = vmul.f32 %v294, %v294
    %v305 = vsel %vm296, %v304, 0.0
    %306 = vadd.xlane.f32.xlu0 %v305
    %v307 = vpop.xlane.xlu0 %306
    %v308 = vmul.f32 %v303, %v307
    %v309 = vmax.f32 %v308, 1e-16
    %v310 = vrsqrt.pop %v309
    %v311 = vmul.f32 %v299, %v310
    %v313 = vlaneseq
    %v314 = vand.u32 %v313, 127
    %v315 = vlaneseq
    %v316 = vshrl.u32 %v315, 7
    %v317 = vsub.s32 %v314, %v316
    %v318 = vrot.slane %v311, %v317
    %vm320 = vcmask 8192
    %321 = vst.msk [vmem:[#allocation10] sm:$0x1] %vm320, %v318
    // Predicated region
    $region42: #{tpu_custom_call.1} parent=1 // pred_check
      _
    $region43: #{tpu_custom_call.1} parent=1 // pred_check_branch
      %323 = sbr.rel (0) target = $region45
    $region44: #{tpu_custom_call.1} parent=1 // pred_region
      %s325 = ssub.s32 16, 16
      %326 = vsyncadd [#allocation4], %s325
      %s328 = sshll.u32 [#allocation10], 4
      %s329 = int_to_ptr.vmem [resolvable:$true] %s328
      %331 = dma.vmem_to_hbm [thread:$0]  %s329, 16, %s6, [#allocation4]
    $region45: #{tpu_custom_call.1} parent=1 // pred_fallthru
      _
    // Predicated region
    $region46: #{tpu_custom_call.1} parent=1 // pred_check
      _
    $region47: #{tpu_custom_call.1} parent=1 // pred_check_branch
      %333 = sbr.rel (0) target = $region49
    $region48: #{tpu_custom_call.1} parent=1 // pred_region
      %334 = dma.done [#allocation4], 16
    $region49: #{tpu_custom_call.1} parent=1 // pred_fallthru
      _
    %335 = vsyncpa [#allocation3], 1
    %336 = vsyncpa [#allocation6], 1
    %337 = vsyncpa [#allocation9], 1
    %338 = vsyncpa [#allocation4], 1

</llo_original>
